<compile_context>
chip_gen: v6e
topology: v6e:2x2x1
jax: 0.10.0
libtpu: 0.0.40
codegen_flags: <defaults>
</compile_context>

<pallas_src>
import functools

import jax
import jax.numpy as jnp
from jax import lax
from jax.experimental import pallas as pl
from jax.experimental.pallas import tpu as pltpu

LANE = 128  # TPU lane width; head dim is padded to a multiple of this


def _round_up(x, m):
    return (x + m - 1) // m * m


def _seq_tile(t):
    # q/kv sequence tile: 128 when it divides T, otherwise the full (small) T.
    if t >= 128 and t % 128 == 0:
        return 128
    return t


# ---------------------------------------------------------------------------
# Kernel 1: fused, lane-dense QKV projection.
#   x (TM, C) @ wqkv (C, 3*H_pad) -> k, q, v tiles (TM, H_pad) each, stored bf16.
#   The 1/sqrt(n_embd) scale is folded into q here (once per q element).
# ---------------------------------------------------------------------------
def qkv_proj_kernel(x_ref, w_ref, k_ref, q_ref, v_ref, *, h_pad, scale):
    x = x_ref[...].astype(jnp.bfloat16)          # bf16 operands -> native MXU fast path
    w = w_ref[...].astype(jnp.bfloat16)
    qkv = lax.dot_general(
        x, w,
        dimension_numbers=(((1,), (0,)), ((), ())),
        preferred_element_type=jnp.float32)      # (TM, 3*H_pad), f32 accumulation
    # 128-lane-aligned column slices: free views, lane-dense stores.
    k_ref[...] = qkv[:, 0:h_pad].astype(k_ref.dtype)
    q_ref[...] = (qkv[:, h_pad:2 * h_pad] * scale).astype(q_ref.dtype)
    v_ref[...] = qkv[:, 2 * h_pad:3 * h_pad].astype(v_ref.dtype)


# ---------------------------------------------------------------------------
# Kernel 2: flash-style causal attention with online softmax.
#   grid = (B, T//TQ, T//TK); kv axis innermost ("arbitrary"), batch & q-tile
#   axes "parallel" (sharded across TensorCores on v7x).
# ---------------------------------------------------------------------------
def flash_attn_kernel(q_ref, k_ref, v_ref, o_ref, m_sc, l_sc, acc_sc, *, tq, tk):
    qi = pl.program_id(1)
    ki = pl.program_id(2)

    @pl.when(ki == 0)
    def _init():
        m_sc[...] = jnp.full(m_sc.shape, -jnp.inf, dtype=jnp.float32)
        l_sc[...] = jnp.zeros(l_sc.shape, jnp.float32)
        acc_sc[...] = jnp.zeros(acc_sc.shape, jnp.float32)

    # Skip KV tiles that lie entirely above the causal diagonal (~2x fewer score FLOPs).
    @pl.when(ki * tk < (qi + 1) * tq)
    def _compute():
        q = q_ref[...]                            # (tq, H_pad) bf16, scale already folded in
        k = k_ref[...]                            # (tk, H_pad) bf16
        # q @ k^T via contracted last dims -- bf16 MXU, f32 accumulation, no transpose.
        s = lax.dot_general(
            q, k,
            dimension_numbers=(((1,), (1,)), ((), ())),
            preferred_element_type=jnp.float32)   # (tq, tk) f32

        row = qi * tq + lax.broadcasted_iota(jnp.int32, (tq, tk), 0)
        col = ki * tk + lax.broadcasted_iota(jnp.int32, (tq, tk), 1)
        s = jnp.where(row >= col, s, -jnp.inf)    # causal (tril) mask

        m_prev = m_sc[...]
        m_new = jnp.maximum(m_prev, jnp.max(s, axis=-1, keepdims=True))
        alpha = jnp.exp(m_prev - m_new)
        p = jnp.exp(s - m_new)                    # (tq, tk) f32
        l_sc[...] = alpha * l_sc[...] + jnp.sum(p, axis=-1, keepdims=True)
        acc_sc[...] = alpha * acc_sc[...] + jnp.dot(
            p.astype(jnp.bfloat16), v_ref[...],   # bf16 operands, f32 accumulation
            preferred_element_type=jnp.float32)
        m_sc[...] = m_new

    @pl.when(ki == pl.num_programs(2) - 1)
    def _finalize():
        # dropout on attention weights: identity (eval mode)
        inv_l = pl.reciprocal(l_sc[...], approx=True)   # EUP slot, frees VALU
        o_ref[...] = (acc_sc[...] * inv_l).astype(o_ref.dtype)


# ---------------------------------------------------------------------------
# Wrappers
# ---------------------------------------------------------------------------
def fuse_qkv_weights(wk, wq, wv):
    """Pad each (C, H) projection to 128 lanes and fuse to (C, 3*H_pad).

    Parameter preprocessing: call ONCE outside the per-step path.
    Segment order: [k | q | v], each segment 128-lane aligned.
    """
    C, H = wk.shape
    h_pad = _round_up(H, LANE)

    def pad(w):
        return jnp.pad(w, ((0, 0), (0, h_pad - H)))

    return jnp.concatenate([pad(wk), pad(wq), pad(wv)], axis=1), h_pad


def head_forward(x, wqkv, h_pad, head_size):
    """x: (B, T, C); wqkv: (C, 3*h_pad) fused/padded weights. Returns (B, T, head_size)."""
    B, T, C = x.shape
    three_h_pad = wqkv.shape[1]
    assert three_h_pad == 3 * h_pad
    scale = float(C) ** -0.5            # matches PyTorch: scale uses n_embd, not head_size

    # ---- kernel 1: fused QKV projection over row tiles of the flattened batch ----
    rows = B * T
    x2d = x.reshape(rows, C)
    tm = rows if rows <= 256 else 256
    if rows % tm:
        tm = rows                        # fallback for non-divisible (toy) shapes

    k2d, q2d, v2d = pl.pallas_call(
        functools.partial(qkv_proj_kernel, h_pad=h_pad, scale=scale),
        out_shape=(jax.ShapeDtypeStruct((rows, h_pad), jnp.bfloat16),) * 3,
        grid_spec=pltpu.PrefetchScalarGridSpec(
            num_scalar_prefetch=0,
            grid=(rows // tm,),
            in_specs=[
                pl.BlockSpec((tm, C), lambda i: (i, 0)),
                pl.BlockSpec((C, three_h_pad), lambda i: (0, 0)),
            ],
            out_specs=[pl.BlockSpec((tm, h_pad), lambda i: (i, 0))] * 3,
        ),
        compiler_params=pltpu.CompilerParams(
            dimension_semantics=("parallel",)),
        cost_estimate=pl.CostEstimate(
            flops=2 * rows * C * three_h_pad,
            transcendentals=0,
            bytes_accessed=(x2d.size * x2d.dtype.itemsize
                            + wqkv.size * wqkv.dtype.itemsize
                            + 3 * rows * h_pad * 2)),
    )(x2d, wqkv)

    q3 = q2d.reshape(B, T, h_pad)        # free contiguous reshapes
    k3 = k2d.reshape(B, T, h_pad)
    v3 = v2d.reshape(B, T, h_pad)

    # ---- kernel 2: flash attention over (batch, q-tile, kv-tile) grid ----
    tq = _seq_tile(T)
    tk = _seq_tile(T)

    out = pl.pallas_call(
        functools.partial(flash_attn_kernel, tq=tq, tk=tk),
        out_shape=jax.ShapeDtypeStruct((B, T, h_pad), x.dtype),
        grid_spec=pltpu.PrefetchScalarGridSpec(
            num_scalar_prefetch=0,
            grid=(B, T // tq, T // tk),
            in_specs=[
                pl.BlockSpec((None, tq, h_pad), lambda b, i, j: (b, i, 0)),   # q
                pl.BlockSpec((None, tk, h_pad), lambda b, i, j: (b, j, 0)),   # k
                pl.BlockSpec((None, tk, h_pad), lambda b, i, j: (b, j, 0)),   # v
            ],
            out_specs=pl.BlockSpec((None, tq, h_pad), lambda b, i, j: (b, i, 0)),
            scratch_shapes=[
                pltpu.VMEM((tq, 1), jnp.float32),       # running max  m
                pltpu.VMEM((tq, 1), jnp.float32),       # running sum  l
                pltpu.VMEM((tq, h_pad), jnp.float32),   # output accumulator
            ],
        ),
        compiler_params=pltpu.CompilerParams(
            dimension_semantics=("parallel", "parallel", "arbitrary")),
        cost_estimate=pl.CostEstimate(
            flops=4 * B * T * T * h_pad,
            transcendentals=B * T * T,
            bytes_accessed=(3 * B * T * h_pad * 2
                            + B * T * h_pad * x.dtype.itemsize)),
    )(q3, k3, v3)

    return out[:, :, :head_size]


def reference_head(x, wk, wq, wv):
    """Pure-JAX reference mirroring the PyTorch forward (eval mode)."""
    B, T, C = x.shape
    k = x @ wk
    q = x @ wq
    v = x @ wv
    wei = (q @ jnp.swapaxes(k, -2, -1)) * (C ** -0.5)
    tril = jnp.tril(jnp.ones((T, T), dtype=bool))
    wei = jnp.where(tril, wei, -jnp.inf)
    wei = jax.nn.softmax(wei, axis=-1)
    return wei @ v


if __name__ == "__main__":
    # small, module-consistent shapes
    B, T = 2, 8           # batch, sequence (T <= block_size)
    n_embd = 32           # C
    head_size = 16        # H

    key = jax.random.PRNGKey(0)
    kx, kk, kq, kv = jax.random.split(key, 4)

    x = jax.random.normal(kx, (B, T, n_embd), dtype=jnp.float32)
    # deterministic parameter init (nn.Linear(n_embd, head_size, bias=False))
    wk = jax.random.normal(kk, (n_embd, head_size), dtype=jnp.float32) * 0.02
    wq = jax.random.normal(kq, (n_embd, head_size), dtype=jnp.float32) * 0.02
    wv = jax.random.normal(kv, (n_embd, head_size), dtype=jnp.float32) * 0.02

    # Parameter preprocessing done once, outside the per-call path.
    wqkv, h_pad = fuse_qkv_weights(wk, wq, wv)

    out = head_forward(x, wqkv, h_pad, head_size)
    out = jax.block_until_ready(out)

    ref = reference_head(x, wk, wq, wv)
    assert out.shape == (B, T, head_size)
    # bf16 MXU operands + approx reciprocal => loosened but still tight tolerance.
    assert jnp.allclose(out, ref, atol=2e-2, rtol=2e-2), "mismatch vs reference"

    print("KERNEL_OK")
</pallas_src>

<mosaic_0001>
module attributes {stable_mosaic.version = 11 : i64} {
  func.func @qkv_proj_kernel(%arg0: i32, %arg1: memref<16x32xf32, #tpu.memory_space<vmem>>, %arg2: memref<32x384xf32, #tpu.memory_space<vmem>>, %arg3: memref<16x128xbf16, #tpu.memory_space<vmem>>, %arg4: memref<16x128xbf16, #tpu.memory_space<vmem>>, %arg5: memref<16x128xbf16, #tpu.memory_space<vmem>>) attributes {dimension_semantics = [#tpu.dimension_semantics<parallel>], iteration_bounds = array<i64: 1>, scalar_prefetch = 0 : i64, scratch_operands = 0 : i64, tpu.core_type = #tpu.core_type<tc>, window_params = [{transform_indices = @transform_0, window_bounds = array<i64: 16, 32>}, {pipeline_mode = #tpu.pipeline_mode<synchronous>, transform_indices = @transform_1, window_bounds = array<i64: 32, 384>}, {transform_indices = @transform_2, window_bounds = array<i64: 16, 128>}, {transform_indices = @transform_3, window_bounds = array<i64: 16, 128>}, {transform_indices = @transform_4, window_bounds = array<i64: 16, 128>}]} {
    %c0 = arith.constant 0 : index
    %c0_0 = arith.constant 0 : index
    %0 = vector.load %arg1[%c0, %c0_0] : memref<16x32xf32, #tpu.memory_space<vmem>>, vector<16x32xf32>
    %1 = arith.truncf %0 : vector<16x32xf32> to vector<16x32xbf16>
    %c0_1 = arith.constant 0 : index
    %c0_2 = arith.constant 0 : index
    %2 = vector.load %arg2[%c0_1, %c0_2] : memref<32x384xf32, #tpu.memory_space<vmem>>, vector<32x384xf32>
    %3 = arith.truncf %2 : vector<32x384xf32> to vector<32x384xbf16>
    %cst = arith.constant dense<0.000000e+00> : vector<16x384xf32>
    %4 = tpu.matmul %1, %3, %cst {dimension_numbers = #tpu.dot_dimension_numbers<[1], [0], [0], [1], [0, 0, 1, 1], [], []>} : vector<16x32xbf16>, vector<32x384xbf16>, vector<16x384xf32> -> vector<16x384xf32>
    %5 = vector.extract_strided_slice %4 {offsets = [0, 0], sizes = [16, 128], strides = [1, 1]} : vector<16x384xf32> to vector<16x128xf32>
    %6 = arith.truncf %5 : vector<16x128xf32> to vector<16x128xbf16>
    %c0_3 = arith.constant 0 : index
    %c0_4 = arith.constant 0 : index
    %7 = vector.load %arg3[%c0_3, %c0_4] : memref<16x128xbf16, #tpu.memory_space<vmem>>, vector<16x128xbf16>
    tpu.vector_store %arg3[%c0_3, %c0_4], %6 {strides = array<i32>} : memref<16x128xbf16, #tpu.memory_space<vmem>>, vector<16x128xbf16>,
    %8 = vector.extract_strided_slice %4 {offsets = [0, 128], sizes = [16, 128], strides = [1, 1]} : vector<16x384xf32> to vector<16x128xf32>
    %cst_5 = arith.constant 0.176776692 : f32
    %9 = vector.broadcast %cst_5 : f32 to vector<16x128xf32>
    %10 = arith.mulf %8, %9 : vector<16x128xf32>
    %11 = arith.truncf %10 : vector<16x128xf32> to vector<16x128xbf16>
    %c0_6 = arith.constant 0 : index
    %c0_7 = arith.constant 0 : index
    %12 = vector.load %arg4[%c0_6, %c0_7] : memref<16x128xbf16, #tpu.memory_space<vmem>>, vector<16x128xbf16>
    tpu.vector_store %arg4[%c0_6, %c0_7], %11 {strides = array<i32>} : memref<16x128xbf16, #tpu.memory_space<vmem>>, vector<16x128xbf16>,
    %13 = vector.extract_strided_slice %4 {offsets = [0, 256], sizes = [16, 128], strides = [1, 1]} : vector<16x384xf32> to vector<16x128xf32>
    %14 = arith.truncf %13 : vector<16x128xf32> to vector<16x128xbf16>
    %c0_8 = arith.constant 0 : index
    %c0_9 = arith.constant 0 : index
    %15 = vector.load %arg5[%c0_8, %c0_9] : memref<16x128xbf16, #tpu.memory_space<vmem>>, vector<16x128xbf16>
    tpu.vector_store %arg5[%c0_8, %c0_9], %14 {strides = array<i32>} : memref<16x128xbf16, #tpu.memory_space<vmem>>, vector<16x128xbf16>,
    return
  }
  func.func @transform_0(%arg0: i32) -> (i32, i32) {
    %c0_i32 = arith.constant 0 : i32
    %c0_i32_0 = arith.constant 0 : i32
    return %arg0, %c0_i32 : i32, i32
  }
  func.func @transform_1(%arg0: i32) -> (i32, i32) {
    %c0_i32 = arith.constant 0 : i32
    %c0_i32_0 = arith.constant 0 : i32
    %c0_i32_1 = arith.constant 0 : i32
    return %c0_i32, %c0_i32_0 : i32, i32
  }
  func.func @transform_2(%arg0: i32) -> (i32, i32) {
    %c0_i32 = arith.constant 0 : i32
    %c0_i32_0 = arith.constant 0 : i32
    return %arg0, %c0_i32 : i32, i32
  }
  func.func @transform_3(%arg0: i32) -> (i32, i32) {
    %c0_i32 = arith.constant 0 : i32
    %c0_i32_0 = arith.constant 0 : i32
    return %arg0, %c0_i32 : i32, i32
  }
  func.func @transform_4(%arg0: i32) -> (i32, i32) {
    %c0_i32 = arith.constant 0 : i32
    %c0_i32_0 = arith.constant 0 : i32
    return %arg0, %c0_i32 : i32, i32
  }
}

</mosaic_0001>

<llo_original>
// kernel: tpu_custom_call.1
$region0: #{tpu_custom_call.1}
  #allocation0 [shape = 'u32[]', space=smem, size = 0x4, offset = 0x4, fixed_abs, tag = 'smem constant byte address 0x4 - core index']
  #allocation1 [shape = 'u32[144,128]{1,0:T(1,128)}', space=vmem, size = 0x12000, scoped, tag = 'internal scratch']
  %s0 = inlined_call_operand.hbm [shape: f32[16,32], index: 0, kind: input, shape index: {}]
  %s1 = inlined_call_operand.hbm [shape: f32[32,384], index: 1, kind: input, shape index: {}]
  %s2 = inlined_call_operand.hbm [shape: bf16[16,128], index: 2, kind: output, shape index: {0}]
  %s3 = inlined_call_operand.hbm [shape: bf16[16,128], index: 3, kind: output, shape index: {1}]
  %s4 = inlined_call_operand.hbm [shape: bf16[16,128], index: 4, kind: output, shape index: {2}]
  %5 = xla_tuple %s2, %s3, %s4
  %s6 = sld [smem:[#allocation0]]
  $region42: #{tpu_custom_call.1} parent=0
    _
  %s8 = ssub.s32 1, %s6
  %s9 = scalar_select 0, %s8, %s6
  $region1: #{tpu_custom_call.1} parent=0
    #allocation2 [shape = 'u8[8192]{0}', space=vmem, size = 0x2000, scoped, tag = 'input window, operand 0, single buffered']
    #allocation3 [shape = 's32[1]{0}', space=sflag, size = 0x4, scoped, tag = 'scoped memory for tpu_custom_call.1']
    #allocation4 [shape = 's32[1]{0}', space=sflag, size = 0x4, scoped, tag = 'scoped memory for tpu_custom_call.1']
    #allocation5 [shape = 'u8[49152]{0}', space=vmem, size = 0xc000, scoped, tag = 'input window, operand 1, single buffered']
    #allocation6 [shape = 's32[1]{0}', space=sflag, size = 0x4, scoped, tag = 'scoped memory for tpu_custom_call.1']
    #allocation7 [shape = 'u8[4096]{0}', space=vmem, size = 0x1000, scoped, tag = 'output window, operand 0, single buffered']
    #allocation8 [shape = 'u8[4096]{0}', space=vmem, size = 0x1000, scoped, tag = 'output window, operand 1, single buffered']
    #allocation9 [shape = 's32[1]{0}', space=sflag, size = 0x4, scoped, tag = 'scoped memory for tpu_custom_call.1']
    #allocation10 [shape = 'u8[4096]{0}', space=vmem, size = 0x1000, scoped, tag = 'output window, operand 2, single buffered']
    %10 = vsyncpa [#allocation3], 0
    %11 = vsyncpa [#allocation6], 0
    %12 = vsyncpa [#allocation4], 0
    %13 = vsyncpa [#allocation9], 0
    // Predicated region
    $region2: #{tpu_custom_call.1} parent=1 // pred_check
      _
    $region3: #{tpu_custom_call.1} parent=1 // pred_check_branch
      %15 = sbr.rel (0) target = $region5
    $region4: #{tpu_custom_call.1} parent=1 // pred_region
      %s17 = ssub.s32 256, 256
      %18 = vsyncadd [#allocation3], %s17
      %s19 = sshll.u32 [#allocation2], 4
      %s20 = int_to_ptr.vmem [resolvable:$true] %s19
      %25 = dma.hbm_to_vmem [thread:$0]  %s0, 256, %s20, [#allocation3], 128, 128, 8
    $region5: #{tpu_custom_call.1} parent=1 // pred_fallthru
      _
    // Predicated region
    $region6: #{tpu_custom_call.1} parent=1 // pred_check
      _
    $region7: #{tpu_custom_call.1} parent=1 // pred_check_branch
      %27 = sbr.rel (0) target = $region9
    $region8: #{tpu_custom_call.1} parent=1 // pred_region
      %s29 = ssub.s32 1536, 1536
      %30 = vsyncadd [#allocation6], %s29
      %s31 = sshll.u32 [#allocation5], 4
      %s32 = int_to_ptr.vmem [resolvable:$true] %s31
      %37 = dma.hbm_to_vmem [thread:$0]  %s1, 1536, %s32, [#allocation6], 384, 384, 24
    $region9: #{tpu_custom_call.1} parent=1 // pred_fallthru
      _
    // Predicated region
    $region10: #{tpu_custom_call.1} parent=1 // pred_check
      _
    $region11: #{tpu_custom_call.1} parent=1 // pred_check_branch
      %39 = sbr.rel (0) target = $region13
    $region12: #{tpu_custom_call.1} parent=1 // pred_region
      %40 = dma.done [#allocation3], 256
    $region13: #{tpu_custom_call.1} parent=1 // pred_fallthru
      _
    // Predicated region
    $region14: #{tpu_custom_call.1} parent=1 // pred_check
      _
    $region15: #{tpu_custom_call.1} parent=1 // pred_check_branch
      %42 = sbr.rel (0) target = $region17
    $region16: #{tpu_custom_call.1} parent=1 // pred_region
      %43 = dma.done [#allocation6], 1536
    $region17: #{tpu_custom_call.1} parent=1 // pred_fallthru
      _
    %v45 = vld [vmem:[#allocation2] sm:$0xff]
    %v46 = vld [vmem:[#allocation2 + $0x8] sm:$0xff]
    %v47 = vpack.c.bf16 %v46, %v45
    %v48 = vld [vmem:[#allocation5] sm:$0xff]
    %v49 = vld [vmem:[#allocation5 + $0x8] sm:$0xff]
    %v50 = vld [vmem:[#allocation5 + $0x10] sm:$0xff]
    %v51 = vld [vmem:[#allocation5 + $0x18] sm:$0xff]
    %v52 = vld [vmem:[#allocation5 + $0x20] sm:$0xff]
    %v53 = vld [vmem:[#allocation5 + $0x28] sm:$0xff]
    %v54 = vld [vmem:[#allocation5 + $0x30] sm:$0xff]
    %v55 = vld [vmem:[#allocation5 + $0x38] sm:$0xff]
    %v56 = vld [vmem:[#allocation5 + $0x40] sm:$0xff]
    %v57 = vld [vmem:[#allocation5 + $0x48] sm:$0xff]
    %v58 = vld [vmem:[#allocation5 + $0x50] sm:$0xff]
    %v59 = vld [vmem:[#allocation5 + $0x58] sm:$0xff]
    %v60 = vpack.c.bf16 %v51, %v48
    %v61 = vpack.c.bf16 %v52, %v49
    %v62 = vpack.c.bf16 %v53, %v50
    %v63 = vpack.c.bf16 %v57, %v54
    %v64 = vpack.c.bf16 %v58, %v55
    %v65 = vpack.c.bf16 %v59, %v56
    %vm66 = vcmask 261120
    %v68 = vsel %vm66, %v47, 0
    %70 = vmatprep.subr.bf16.mxu0 0
    %71 = vmatpush1.bf16.msra.mxu0 0
    %72 = vmatprep.subr.bf16.mxu0 0
    %73 = vmatpush1.bf16.msra.mxu0 0
    %74 = vmatprep.subr.bf16.mxu0 0
    %75 = vmatpush1.bf16.msra.mxu0 0
    %76 = vmatprep.subr.bf16.mxu0 0
    %77 = vmatpush1.bf16.msra.mxu0 0
    %78 = vmatprep.subr.bf16.mxu0 0
    %79 = vmatpush1.bf16.msra.mxu0 0
    %80 = vmatprep.subr.bf16.mxu0 0
    %81 = vmatpush1.bf16.msra.mxu0 0
    %82 = vmatprep.subr.bf16.mxu0 %v64
    %83 = vmatpush1.bf16.msra.mxu0 %v63
    %84 = vmatprep.subr.bf16.mxu0 %v61
    %85 = vmatpush1.bf16.msra.mxu0 %v60
    %86 = vmatprep.subr.bf16.mxu0 0
    %87 = vmatpush2.bf16.msra.mxu0 0
    %88 = vmatprep.subr.bf16.mxu0 0
    %89 = vmatpush2.bf16.msra.mxu0 0
    %90 = vmatprep.subr.bf16.mxu0 0
    %91 = vmatpush2.bf16.msra.mxu0 0
    %92 = vmatprep.subr.bf16.mxu0 0
    %93 = vmatpush2.bf16.msra.mxu0 0
    %94 = vmatprep.subr.bf16.mxu0 0
    %95 = vmatpush2.bf16.msra.mxu0 0
    %96 = vmatprep.subr.bf16.mxu0 0
    %97 = vmatpush2.bf16.msra.mxu0 0
    %98 = vmatprep.subr.bf16.mxu0 0
    %99 = vmatpush2.bf16.msra.mxu0 0
    %100 = vmatprep.subr.bf16.mxu0 0
    %101 = vmatpush2.bf16.msra.mxu0 0
    %102 = vmatprep.mubr.bf16.mxu0 0
    %103 = vmatmul.mubr.bf16.gmra.mxu0 %v68
    %v104 = vpop.f32.mrf.mxu0
    %v105 = vadd.f32 0.0, %v104
    %v106 = vpop.f32.mrf.mxu0
    %v107 = vadd.f32 0.0, %v106
    %v108 = vpop.f32.mrf.mxu0
    %v109 = vadd.f32 0.0, %v108
    %v110 = vpop.f32.mrf.mxu0
    %v111 = vadd.f32 0.0, %v110
    %112 = vdwg.mxu0
    %113 = vmatprep.subr.bf16.mxu0 0
    %114 = vmatpush1.bf16.msra.mxu0 0
    %115 = vmatprep.subr.bf16.mxu0 0
    %116 = vmatpush1.bf16.msra.mxu0 0
    %117 = vmatprep.subr.bf16.mxu0 0
    %118 = vmatpush1.bf16.msra.mxu0 0
    %119 = vmatprep.subr.bf16.mxu0 0
    %120 = vmatpush1.bf16.msra.mxu0 0
    %121 = vmatprep.subr.bf16.mxu0 0
    %122 = vmatpush1.bf16.msra.mxu0 0
    %123 = vmatprep.subr.bf16.mxu0 0
    %124 = vmatpush1.bf16.msra.mxu0 0
    %125 = vmatprep.subr.bf16.mxu0 0
    %126 = vmatpush1.bf16.msra.mxu0 %v65
    %127 = vmatprep.subr.bf16.mxu0 0
    %128 = vmatpush1.bf16.msra.mxu0 %v62
    %129 = vmatprep.subr.bf16.mxu0 0
    %130 = vmatpush2.bf16.msra.mxu0 0
    %131 = vmatprep.subr.bf16.mxu0 0
    %132 = vmatpush2.bf16.msra.mxu0 0
    %133 = vmatprep.subr.bf16.mxu0 0
    %134 = vmatpush2.bf16.msra.mxu0 0
    %135 = vmatprep.subr.bf16.mxu0 0
    %136 = vmatpush2.bf16.msra.mxu0 0
    %137 = vmatprep.subr.bf16.mxu0 0
    %138 = vmatpush2.bf16.msra.mxu0 0
    %139 = vmatprep.subr.bf16.mxu0 0
    %140 = vmatpush2.bf16.msra.mxu0 0
    %141 = vmatprep.subr.bf16.mxu0 0
    %142 = vmatpush2.bf16.msra.mxu0 0
    %143 = vmatprep.subr.bf16.mxu0 0
    %144 = vmatpush2.bf16.msra.mxu0 0
    %145 = vmatprep.mubr.bf16.mxu0 0
    %146 = vmatmul.mubr.bf16.gmra.mxu0 %v68
    %v147 = vpop.f32.mrf.mxu0
    %v148 = vadd.f32 0.0, %v147
    %v149 = vpop.f32.mrf.mxu0
    %v150 = vpop.f32.mrf.mxu0
    %v151 = vadd.f32 0.0, %v150
    %v152 = vpop.f32.mrf.mxu0
    %153 = vdwg.mxu0
    %v154 = vpack.c.bf16 %v109, %v105
    %v156 = vunpack.c.l.b16 %v154
    %v157 = vunpack.c.h.b16 %v154
    %v158 = vpack.c.b16 %v156, %v156
    %v159 = vpack.c.b16 %v157, %v157
    %162 = vst [vmem:[#allocation7] sm:$0xf] %v158
    %163 = vst [vmem:[#allocation7 + $0x4] sm:$0xf] %v159
    %v164 = vmul.f32 %v107, 0.17677669
    %v165 = vmul.f32 %v111, 0.17677669
    %v166 = vpack.c.bf16 %v165, %v164
    %v168 = vunpack.c.l.b16 %v166
    %v169 = vunpack.c.h.b16 %v166
    %v170 = vpack.c.b16 %v168, %v168
    %v171 = vpack.c.b16 %v169, %v169
    %174 = vst [vmem:[#allocation8] sm:$0xf] %v170
    %175 = vst [vmem:[#allocation8 + $0x4] sm:$0xf] %v171
    %v176 = vpack.c.bf16 %v151, %v148
    %v178 = vunpack.c.l.b16 %v176
    %v179 = vunpack.c.h.b16 %v176
    %v180 = vpack.c.b16 %v178, %v178
    %v181 = vpack.c.b16 %v179, %v179
    %184 = vst [vmem:[#allocation10] sm:$0xf] %v180
    %185 = vst [vmem:[#allocation10 + $0x4] sm:$0xf] %v181
    // Predicated region
    $region18: #{tpu_custom_call.1} parent=1 // pred_check
      _
    $region19: #{tpu_custom_call.1} parent=1 // pred_check_branch
      %187 = sbr.rel (0) target = $region21
    $region20: #{tpu_custom_call.1} parent=1 // pred_region
      %s189 = ssub.s32 128, 128
      %190 = vsyncadd [#allocation4], %s189
      %s191 = sshll.u32 [#allocation7], 4
      %s192 = int_to_ptr.vmem [resolvable:$true] %s191
      %197 = dma.vmem_to_hbm [thread:$0]  %s192, 128, %s2, [#allocation4], 64, 64, 4
    $region21: #{tpu_custom_call.1} parent=1 // pred_fallthru
      _
    // Predicated region
    $region22: #{tpu_custom_call.1} parent=1 // pred_check
      _
    $region23: #{tpu_custom_call.1} parent=1 // pred_check_branch
      %199 = sbr.rel (0) target = $region25
    $region24: #{tpu_custom_call.1} parent=1 // pred_region
      %s201 = ssub.s32 128, 128
      %202 = vsyncadd [#allocation9], %s201
      %s203 = sshll.u32 [#allocation8], 4
      %s204 = int_to_ptr.vmem [resolvable:$true] %s203
      %209 = dma.vmem_to_hbm [thread:$0]  %s204, 128, %s3, [#allocation9], 64, 64, 4
    $region25: #{tpu_custom_call.1} parent=1 // pred_fallthru
      _
    // Predicated region
    $region26: #{tpu_custom_call.1} parent=1 // pred_check
      _
    $region27: #{tpu_custom_call.1} parent=1 // pred_check_branch
      %211 = sbr.rel (0) target = $region29
    $region28: #{tpu_custom_call.1} parent=1 // pred_region
      %s213 = ssub.s32 128, 128
      %214 = vsyncadd [#allocation9], %s213
      %s215 = sshll.u32 [#allocation10], 4
      %s216 = int_to_ptr.vmem [resolvable:$true] %s215
      %221 = dma.vmem_to_hbm [thread:$0]  %s216, 128, %s4, [#allocation9], 64, 64, 4
    $region29: #{tpu_custom_call.1} parent=1 // pred_fallthru
      _
    // Predicated region
    $region30: #{tpu_custom_call.1} parent=1 // pred_check
      _
    $region31: #{tpu_custom_call.1} parent=1 // pred_check_branch
      %223 = sbr.rel (0) target = $region33
    $region32: #{tpu_custom_call.1} parent=1 // pred_region
      %224 = dma.done [#allocation4], 128
    $region33: #{tpu_custom_call.1} parent=1 // pred_fallthru
      _
    // Predicated region
    $region34: #{tpu_custom_call.1} parent=1 // pred_check
      _
    $region35: #{tpu_custom_call.1} parent=1 // pred_check_branch
      %226 = sbr.rel (0) target = $region37
    $region36: #{tpu_custom_call.1} parent=1 // pred_region
      %227 = dma.done [#allocation9], 128
    $region37: #{tpu_custom_call.1} parent=1 // pred_fallthru
      _
    // Predicated region
    $region38: #{tpu_custom_call.1} parent=1 // pred_check
      _
    $region39: #{tpu_custom_call.1} parent=1 // pred_check_branch
      %229 = sbr.rel (0) target = $region41
    $region40: #{tpu_custom_call.1} parent=1 // pred_region
      %230 = dma.done [#allocation9], 128
    $region41: #{tpu_custom_call.1} parent=1 // pred_fallthru
      _
    %231 = vsyncpa [#allocation3], 1
    %232 = vsyncpa [#allocation6], 1
    %233 = vsyncpa [#allocation4], 1
    %234 = vsyncpa [#allocation9], 1

</llo_original>
